<compile_context>
chip_gen: v5e
topology: v5e:2x2
jax: 0.10.0
libtpu: 0.0.40
codegen_flags: <defaults>
</compile_context>

<pallas_src>
import jax
import jax.numpy as jnp
import numpy as np
from jax.experimental import pallas as pl
from jax.experimental.pallas import tpu as pltpu


def _round_up(a, m):
    return (a + m - 1) // m * m


def conv2d_pallas(x, weight, bias, stride=1, padding=0):
    """x: (N, IC, H, W) f32; weight: (OC, IC, KH, KW) f32; bias: (OC,) f32 -> NCHW f32."""
    N, IC, H, W = x.shape
    OC, _, KH, KW = weight.shape
    assert stride == 1 and padding == 0  # matches nn.Conv2d(3, 6, 3, stride=1, padding=0)
    OH = H - KH + 1
    OW = W - KW + 1

    ICP = 8                        # input channels padded to one f32 sublane granule
    OCS = 8                        # output channels padded to 8 sublanes (compact writeback)
    KP = KH * KW * ICP             # fused contraction dim (72): every row written, no zero-fill
    MP = _round_up(OH * W, 128)    # "wide" spatial lanes per image (lane-dense stores)
    s_max = (KH - 1) * W + (KW - 1)
    HWP = _round_up(max(H * W, s_max + MP), 128)   # padded flat input length: tap slices stay in bounds

    # ---- images per grid step: bigger matmuls, but keep >=2 (ideally >=4) steps for pipelining ----
    B = 1
    for steps_min in (4, 2):
        for cand in (8, 4, 2):
            if N % cand == 0 and N // cand >= steps_min:
                B = cand
                break
        if B > 1:
            break

    # ---------------- wrapper-side layout prep (tiny, no transposes on the input) ----------------
    x_cm = x.reshape(N, IC, H * W)
    x_cm = jnp.pad(x_cm, ((0, 0), (0, ICP - IC), (0, HWP - H * W))).astype(jnp.bfloat16)  # (N,8,HWP)

    # weight (OC, IC, KH, KW) -> (OCS, KP), column layout (kh*KW + kw)*ICP + ic
    w_t = jnp.transpose(weight, (0, 2, 3, 1))                              # (OC, KH, KW, IC)
    w_t = jnp.pad(w_t, ((0, OCS - OC), (0, 0), (0, 0), (0, ICP - IC)))
    w_t = w_t.reshape(OCS, KP).astype(jnp.bfloat16)                        # (8, 72)

    b_p = jnp.pad(bias, (0, OCS - OC)).astype(jnp.float32).reshape(OCS, 1)
    b_p = jnp.broadcast_to(b_p, (OCS, MP))                                 # (8, MP), resident

    # --------------------------------------- kernel ----------------------------------------------
    def kernel(x_ref, w_ref, b_ref, out_ref, patch_ref):
        # x_ref:     (B, ICP, HWP) bf16  -- channel-major, flattened + zero-padded spatial
        # w_ref:     (OCS, KP)     bf16  -- resident across grid steps
        # b_ref:     (OCS, MP)     f32   -- resident
        # out_ref:   (B, OCS, MP)  f32   -- channels on sublanes, wide spatial on lanes
        # patch_ref: (KP, B*MP)    f32   -- VMEM im2col scratch
        for b in range(B):
            for kh in range(KH):
                for kw in range(KW):
                    t = kh * KW + kw
                    s = kh * W + kw          # constant flat shift for this tap
                    patch_ref[t * ICP:(t + 1) * ICP, b * MP:(b + 1) * MP] = (
                        x_ref[b, :, s:s + MP].astype(jnp.float32))
        # ONE MXU matmul per grid step: (8, 72) x (72, B*MP) -> (8, B*MP), f32 accumulation.
        y = jnp.dot(w_ref[...], patch_ref[...].astype(jnp.bfloat16),
                    preferred_element_type=jnp.float32)
        for b in range(B):
            out_ref[b] = y[:, b * MP:(b + 1) * MP] + b_ref[...]

    out_p = pl.pallas_call(
        kernel,
        out_shape=jax.ShapeDtypeStruct((N, OCS, MP), jnp.float32),
        grid=(N // B,),
        in_specs=[
            pl.BlockSpec((B, ICP, HWP), lambda n: (n, 0, 0)),
            pl.BlockSpec((OCS, KP), lambda n: (0, 0)),     # weights resident
            pl.BlockSpec((OCS, MP), lambda n: (0, 0)),     # bias resident
        ],
        out_specs=pl.BlockSpec((B, OCS, MP), lambda n: (n, 0, 0)),
        scratch_shapes=[pltpu.VMEM((KP, B * MP), jnp.float32)],
        compiler_params=pltpu.CompilerParams(dimension_semantics=("parallel",)),
    )(x_cm, w_t, b_p)

    # Restore PyTorch NCHW: slice channels, drop lane padding, reshape the wide rows,
    # drop the per-row overhang columns.  Slice + reshape only -- no transpose.
    wide = out_p[:, :OC, :OH * W].reshape(N, OC, OH, W)
    return wide[:, :, :, :OW]


# ----------------------------------------- driver -------------------------------------------------
if __name__ == "__main__":
    key = jax.random.PRNGKey(0)
    k_x, k_w, k_b = jax.random.split(key, 3)

    N, IC, H, W = 2, 3, 16, 16
    OC, KH, KW = 6, 3, 3

    # Deterministic init mimicking PyTorch Conv2d default (U[-1/sqrt(fan_in), 1/sqrt(fan_in)])
    fan_in = IC * KH * KW
    bound = 1.0 / np.sqrt(fan_in)
    weight = jax.random.uniform(k_w, (OC, IC, KH, KW), jnp.float32, -bound, bound)
    bias = jax.random.uniform(k_b, (OC,), jnp.float32, -bound, bound)
    x = jax.random.normal(k_x, (N, IC, H, W), jnp.float32)

    conv = jax.jit(conv2d_pallas)
    y = conv(x, weight, bias)
    y = jax.block_until_ready(y)

    # Reference on the same bf16-rounded operands (kernel uses bf16 MXU inputs, f32 acc).
    xr = x.astype(jnp.bfloat16).astype(jnp.float32)
    wr = weight.astype(jnp.bfloat16).astype(jnp.float32)
    y_ref = jax.lax.conv_general_dilated(
        xr, wr, window_strides=(1, 1), padding="VALID",
        dimension_numbers=("NCHW", "OIHW", "NCHW"),
        precision=jax.lax.Precision.HIGHEST)
    y_ref = y_ref + bias.reshape(1, OC, 1, 1)

    assert y.shape == (N, OC, H - KH + 1, W - KW + 1)
    assert np.allclose(np.asarray(y), np.asarray(y_ref), atol=1e-3, rtol=1e-3)

    print("KERNEL_OK")
</pallas_src>

<mosaic_0001>
module attributes {stable_mosaic.version = 11 : i64} {
  func.func @kernel(%arg0: i32, %arg1: memref<1x8x384xbf16, #tpu.memory_space<vmem>>, %arg2: memref<8x72xbf16, #tpu.memory_space<vmem>>, %arg3: memref<8x256xf32, #tpu.memory_space<vmem>>, %arg4: memref<1x8x256xf32, #tpu.memory_space<vmem>>, %arg5: memref<72x256xf32, #tpu.memory_space<vmem>>) attributes {dimension_semantics = [#tpu.dimension_semantics<parallel>], iteration_bounds = array<i64: 2>, scalar_prefetch = 0 : i64, scratch_operands = 1 : i64, tpu.core_type = #tpu.core_type<tc>, window_params = [{transform_indices = @transform_0, window_bounds = array<i64: 1, 8, 384>}, {pipeline_mode = #tpu.pipeline_mode<synchronous>, transform_indices = @transform_1, window_bounds = array<i64: 8, 72>}, {pipeline_mode = #tpu.pipeline_mode<synchronous>, transform_indices = @transform_2, window_bounds = array<i64: 8, 256>}, {transform_indices = @transform_3, window_bounds = array<i64: 1, 8, 256>}]} {
    %c0 = arith.constant 0 : index
    %c0_0 = arith.constant 0 : index
    %c0_1 = arith.constant 0 : index
    %0 = vector.load %arg1[%c0, %c0_0, %c0_1] : memref<1x8x384xbf16, #tpu.memory_space<vmem>>, vector<1x8x256xbf16>
    %1 = vector.shape_cast %0 : vector<1x8x256xbf16> to vector<8x256xbf16>
    %2 = arith.extf %1 : vector<8x256xbf16> to vector<8x256xf32>
    %c0_2 = arith.constant 0 : index
    %c0_3 = arith.constant 0 : index
    %3 = vector.load %arg5[%c0_2, %c0_3] : memref<72x256xf32, #tpu.memory_space<vmem>>, vector<8x256xf32>
    tpu.vector_store %arg5[%c0_2, %c0_3], %2 {strides = array<i32>} : memref<72x256xf32, #tpu.memory_space<vmem>>, vector<8x256xf32>,
    %c0_4 = arith.constant 0 : index
    %c0_5 = arith.constant 0 : index
    %c1 = arith.constant 1 : index
    %4 = vector.load %arg1[%c0_4, %c0_5, %c1] : memref<1x8x384xbf16, #tpu.memory_space<vmem>>, vector<1x8x256xbf16>
    %5 = vector.shape_cast %4 : vector<1x8x256xbf16> to vector<8x256xbf16>
    %6 = arith.extf %5 : vector<8x256xbf16> to vector<8x256xf32>
    %c8 = arith.constant 8 : index
    %c0_6 = arith.constant 0 : index
    %7 = vector.load %arg5[%c8, %c0_6] : memref<72x256xf32, #tpu.memory_space<vmem>>, vector<8x256xf32>
    tpu.vector_store %arg5[%c8, %c0_6], %6 {strides = array<i32>} : memref<72x256xf32, #tpu.memory_space<vmem>>, vector<8x256xf32>,
    %c0_7 = arith.constant 0 : index
    %c0_8 = arith.constant 0 : index
    %c2 = arith.constant 2 : index
    %8 = vector.load %arg1[%c0_7, %c0_8, %c2] : memref<1x8x384xbf16, #tpu.memory_space<vmem>>, vector<1x8x256xbf16>
    %9 = vector.shape_cast %8 : vector<1x8x256xbf16> to vector<8x256xbf16>
    %10 = arith.extf %9 : vector<8x256xbf16> to vector<8x256xf32>
    %c16 = arith.constant 16 : index
    %c0_9 = arith.constant 0 : index
    %11 = vector.load %arg5[%c16, %c0_9] : memref<72x256xf32, #tpu.memory_space<vmem>>, vector<8x256xf32>
    tpu.vector_store %arg5[%c16, %c0_9], %10 {strides = array<i32>} : memref<72x256xf32, #tpu.memory_space<vmem>>, vector<8x256xf32>,
    %c0_10 = arith.constant 0 : index
    %c0_11 = arith.constant 0 : index
    %c16_12 = arith.constant 16 : index
    %12 = vector.load %arg1[%c0_10, %c0_11, %c16_12] : memref<1x8x384xbf16, #tpu.memory_space<vmem>>, vector<1x8x256xbf16>
    %13 = vector.shape_cast %12 : vector<1x8x256xbf16> to vector<8x256xbf16>
    %14 = arith.extf %13 : vector<8x256xbf16> to vector<8x256xf32>
    %c24 = arith.constant 24 : index
    %c0_13 = arith.constant 0 : index
    %15 = vector.load %arg5[%c24, %c0_13] : memref<72x256xf32, #tpu.memory_space<vmem>>, vector<8x256xf32>
    tpu.vector_store %arg5[%c24, %c0_13], %14 {strides = array<i32>} : memref<72x256xf32, #tpu.memory_space<vmem>>, vector<8x256xf32>,
    %c0_14 = arith.constant 0 : index
    %c0_15 = arith.constant 0 : index
    %c17 = arith.constant 17 : index
    %16 = vector.load %arg1[%c0_14, %c0_15, %c17] : memref<1x8x384xbf16, #tpu.memory_space<vmem>>, vector<1x8x256xbf16>
    %17 = vector.shape_cast %16 : vector<1x8x256xbf16> to vector<8x256xbf16>
    %18 = arith.extf %17 : vector<8x256xbf16> to vector<8x256xf32>
    %c32 = arith.constant 32 : index
    %c0_16 = arith.constant 0 : index
    %19 = vector.load %arg5[%c32, %c0_16] : memref<72x256xf32, #tpu.memory_space<vmem>>, vector<8x256xf32>
    tpu.vector_store %arg5[%c32, %c0_16], %18 {strides = array<i32>} : memref<72x256xf32, #tpu.memory_space<vmem>>, vector<8x256xf32>,
    %c0_17 = arith.constant 0 : index
    %c0_18 = arith.constant 0 : index
    %c18 = arith.constant 18 : index
    %20 = vector.load %arg1[%c0_17, %c0_18, %c18] : memref<1x8x384xbf16, #tpu.memory_space<vmem>>, vector<1x8x256xbf16>
    %21 = vector.shape_cast %20 : vector<1x8x256xbf16> to vector<8x256xbf16>
    %22 = arith.extf %21 : vector<8x256xbf16> to vector<8x256xf32>
    %c40 = arith.constant 40 : index
    %c0_19 = arith.constant 0 : index
    %23 = vector.load %arg5[%c40, %c0_19] : memref<72x256xf32, #tpu.memory_space<vmem>>, vector<8x256xf32>
    tpu.vector_store %arg5[%c40, %c0_19], %22 {strides = array<i32>} : memref<72x256xf32, #tpu.memory_space<vmem>>, vector<8x256xf32>,
    %c0_20 = arith.constant 0 : index
    %c0_21 = arith.constant 0 : index
    %c32_22 = arith.constant 32 : index
    %24 = vector.load %arg1[%c0_20, %c0_21, %c32_22] : memref<1x8x384xbf16, #tpu.memory_space<vmem>>, vector<1x8x256xbf16>
    %25 = vector.shape_cast %24 : vector<1x8x256xbf16> to vector<8x256xbf16>
    %26 = arith.extf %25 : vector<8x256xbf16> to vector<8x256xf32>
    %c48 = arith.constant 48 : index
    %c0_23 = arith.constant 0 : index
    %27 = vector.load %arg5[%c48, %c0_23] : memref<72x256xf32, #tpu.memory_space<vmem>>, vector<8x256xf32>
    tpu.vector_store %arg5[%c48, %c0_23], %26 {strides = array<i32>} : memref<72x256xf32, #tpu.memory_space<vmem>>, vector<8x256xf32>,
    %c0_24 = arith.constant 0 : index
    %c0_25 = arith.constant 0 : index
    %c33 = arith.constant 33 : index
    %28 = vector.load %arg1[%c0_24, %c0_25, %c33] : memref<1x8x384xbf16, #tpu.memory_space<vmem>>, vector<1x8x256xbf16>
    %29 = vector.shape_cast %28 : vector<1x8x256xbf16> to vector<8x256xbf16>
    %30 = arith.extf %29 : vector<8x256xbf16> to vector<8x256xf32>
    %c56 = arith.constant 56 : index
    %c0_26 = arith.constant 0 : index
    %31 = vector.load %arg5[%c56, %c0_26] : memref<72x256xf32, #tpu.memory_space<vmem>>, vector<8x256xf32>
    tpu.vector_store %arg5[%c56, %c0_26], %30 {strides = array<i32>} : memref<72x256xf32, #tpu.memory_space<vmem>>, vector<8x256xf32>,
    %c0_27 = arith.constant 0 : index
    %c0_28 = arith.constant 0 : index
    %c34 = arith.constant 34 : index
    %32 = vector.load %arg1[%c0_27, %c0_28, %c34] : memref<1x8x384xbf16, #tpu.memory_space<vmem>>, vector<1x8x256xbf16>
    %33 = vector.shape_cast %32 : vector<1x8x256xbf16> to vector<8x256xbf16>
    %34 = arith.extf %33 : vector<8x256xbf16> to vector<8x256xf32>
    %c64 = arith.constant 64 : index
    %c0_29 = arith.constant 0 : index
    %35 = vector.load %arg5[%c64, %c0_29] : memref<72x256xf32, #tpu.memory_space<vmem>>, vector<8x256xf32>
    tpu.vector_store %arg5[%c64, %c0_29], %34 {strides = array<i32>} : memref<72x256xf32, #tpu.memory_space<vmem>>, vector<8x256xf32>,
    %c0_30 = arith.constant 0 : index
    %c0_31 = arith.constant 0 : index
    %36 = vector.load %arg2[%c0_30, %c0_31] : memref<8x72xbf16, #tpu.memory_space<vmem>>, vector<8x72xbf16>
    %c0_32 = arith.constant 0 : index
    %c0_33 = arith.constant 0 : index
    %37 = vector.load %arg5[%c0_32, %c0_33] : memref<72x256xf32, #tpu.memory_space<vmem>>, vector<72x256xf32>
    %38 = arith.truncf %37 : vector<72x256xf32> to vector<72x256xbf16>
    %cst = arith.constant dense<0.000000e+00> : vector<8x256xf32>
    %39 = tpu.matmul %36, %38, %cst {dimension_numbers = #tpu.dot_dimension_numbers<[1], [0], [0], [1], [0, 0, 1, 1], [], []>} : vector<8x72xbf16>, vector<72x256xbf16>, vector<8x256xf32> -> vector<8x256xf32>
    %c0_34 = arith.constant 0 : index
    %c0_35 = arith.constant 0 : index
    %40 = vector.load %arg3[%c0_34, %c0_35] : memref<8x256xf32, #tpu.memory_space<vmem>>, vector<8x256xf32>
    %41 = arith.addf %39, %40 : vector<8x256xf32>
    %c0_36 = arith.constant 0 : index
    %c0_37 = arith.constant 0 : index
    %c0_38 = arith.constant 0 : index
    %42 = vector.load %arg4[%c0_36, %c0_37, %c0_38] : memref<1x8x256xf32, #tpu.memory_space<vmem>>, vector<1x8x256xf32>
    %43 = vector.shape_cast %42 : vector<1x8x256xf32> to vector<8x256xf32>
    %44 = vector.shape_cast %41 : vector<8x256xf32> to vector<1x8x256xf32>
    tpu.vector_store %arg4[%c0_36, %c0_37, %c0_38], %44 {strides = array<i32>} : memref<1x8x256xf32, #tpu.memory_space<vmem>>, vector<1x8x256xf32>,
    return
  }
  func.func @transform_0(%arg0: i32) -> (i32, i32, i32) {
    %c0_i32 = arith.constant 0 : i32
    %c0_i32_0 = arith.constant 0 : i32
    %c0_i32_1 = arith.constant 0 : i32
    return %arg0, %c0_i32, %c0_i32_0 : i32, i32, i32
  }
  func.func @transform_1(%arg0: i32) -> (i32, i32) {
    %c0_i32 = arith.constant 0 : i32
    %c0_i32_0 = arith.constant 0 : i32
    %c0_i32_1 = arith.constant 0 : i32
    return %c0_i32, %c0_i32_0 : i32, i32
  }
  func.func @transform_2(%arg0: i32) -> (i32, i32) {
    %c0_i32 = arith.constant 0 : i32
    %c0_i32_0 = arith.constant 0 : i32
    %c0_i32_1 = arith.constant 0 : i32
    return %c0_i32, %c0_i32_0 : i32, i32
  }
  func.func @transform_3(%arg0: i32) -> (i32, i32, i32) {
    %c0_i32 = arith.constant 0 : i32
    %c0_i32_0 = arith.constant 0 : i32
    %c0_i32_1 = arith.constant 0 : i32
    return %arg0, %c0_i32, %c0_i32_0 : i32, i32, i32
  }
}

</mosaic_0001>

<llo_original>
// kernel: conv2d_pallas.1
$region0: #{conv2d_pallas.1}
  #allocation0 [shape = 'u32[]', space=smem, size = 0x4, offset = 0x4, fixed_abs, tag = 'smem constant byte address 0x4 - core index']
  #allocation1 [shape = 'u32[72,128]{1,0:T(1,128)}', space=vmem, size = 0x9000, scoped, tag = 'internal scratch']
  #allocation2 [shape = 'f32[72,256]{1,0:T(8,128)}', space=vmem, size = 0x12000, scoped, tag = 'scratch operand']
  %s0 = inlined_call_operand.vmem [shape: bf16[2,8,384], index: 0, kind: input, shape index: {}]
  %s1 = inlined_call_operand.vmem [shape: bf16[8,72], index: 1, kind: input, shape index: {}]
  %s2 = inlined_call_operand.vmem [shape: f32[8,256], index: 2, kind: input, shape index: {}]
  %s3 = inlined_call_operand.vmem [shape: f32[2,8,256], index: 3, kind: output, shape index: {}]
  %s4 = sld [smem:[#allocation0]]
  $region45: #{conv2d_pallas.1} parent=0
    _
  %s6 = ssub.s32 1, %s4
  %s7 = scalar_select 0, %s6, %s4
  loop: start=0, step=1, limit=4
  $region2: #{conv2d_pallas.1} parent=0 // loop_pre_header
    _
  $region3: #{conv2d_pallas.1} parent=0 // loop_header
    %s9 = sphi 0, %s13
    %p10 = scmp.ge.s32.totalorder %s9, 4
    %s19 = sphi 0, %s21
    %s22 = sphi 0, %s19
    %s23 = sphi 0, %s22
    %s39 = sphi 0, %s23
    %s43 = sphi 0, %s43
    %s45 = sphi 0, %s43
    %s46 = sphi 0, %s45
    %s60 = sphi 0, %s46
    %s64 = sphi 0, %s64
    %s66 = sphi 0, %s64
    %s67 = sphi 0, %s66
    %s81 = sphi 0, %s67
    %s87 = sphi 0, %s89
    %s90 = sphi 0, %s87
    %s91 = sphi 0, %s90
    %s107 = sphi 0, %s91
  $region4: #{conv2d_pallas.1} parent=0 // loop_header_branch
    %12 = sbr.rel (%p10) target = $region8
  $region5: #{conv2d_pallas.1} parent=0 // loop_body
    %s14 = ssub.s32 %s9, 1
    %s15 = ssub.s32 %s9, 2
    %s16 = sadd.s32 %s9, 1
    %s17 = ssub.s32 %s9, %s16
    %p18 = scmp.eq.s32.totalorder %s17, 0
    %s20 = sadd.s32 %s19, 1
    %s21 = scalar_select %p18, %s19, %s20
    %p24 = pneg %p18
    %p25 = scmp.eq.s32.totalorder %s9, 1
    %p26 = por %p24, %p25
    %p27 = scmp.ne.s32.totalorder %s19, %s22
    %p28 = scmp.eq.s32.totalorder %s9, 0
    %p29 = por %p27, %p28
    %p30 = scmp.ne.s32.totalorder %s19, %s22
    %p31 = scmp.eq.s32.totalorder %s14, 1
    %p32 = por %p30, %p31
    %p33 = scmp.ne.s32.totalorder %s22, %s23
    %p34 = scmp.eq.s32.totalorder %s14, 0
    %p35 = por %p33, %p34
    %p36 = scmp.ne.s32.totalorder %s22, %s23
    %p37 = scmp.eq.s32.totalorder %s15, 1
    %p38 = por %p36, %p37
    %p40 = scmp.ne.s32.totalorder %s23, %s39
    %p41 = scmp.eq.s32.totalorder %s15, 0
    %p42 = por %p40, %p41
    %s44 = sadd.s32 %s43, 1
    %p47 = scmp.eq.s32.totalorder %s9, 1
    %p48 = scmp.ne.s32.totalorder %s43, %s45
    %p49 = scmp.eq.s32.totalorder %s9, 0
    %p50 = por %p48, %p49
    %p51 = scmp.ne.s32.totalorder %s43, %s45
    %p52 = scmp.eq.s32.totalorder %s14, 1
    %p53 = por %p51, %p52
    %p54 = scmp.ne.s32.totalorder %s45, %s46
    %p55 = scmp.eq.s32.totalorder %s14, 0
    %p56 = por %p54, %p55
    %p57 = scmp.ne.s32.totalorder %s45, %s46
    %p58 = scmp.eq.s32.totalorder %s15, 1
    %p59 = por %p57, %p58
    %p61 = scmp.ne.s32.totalorder %s46, %s60
    %p62 = scmp.eq.s32.totalorder %s15, 0
    %p63 = por %p61, %p62
    %s65 = sadd.s32 %s64, 1
    %p68 = scmp.eq.s32.totalorder %s9, 1
    %p69 = scmp.ne.s32.totalorder %s64, %s66
    %p70 = scmp.eq.s32.totalorder %s9, 0
    %p71 = por %p69, %p70
    %p72 = scmp.ne.s32.totalorder %s64, %s66
    %p73 = scmp.eq.s32.totalorder %s14, 1
    %p74 = por %p72, %p73
    %p75 = scmp.ne.s32.totalorder %s66, %s67
    %p76 = scmp.eq.s32.totalorder %s14, 0
    %p77 = por %p75, %p76
    %p78 = scmp.ne.s32.totalorder %s66, %s67
    %p79 = scmp.eq.s32.totalorder %s15, 1
    %p80 = por %p78, %p79
    %p82 = scmp.ne.s32.totalorder %s67, %s81
    %p83 = scmp.eq.s32.totalorder %s15, 0
    %p84 = por %p82, %p83
    %s85 = ssub.s32 %s9, %s16
    %p86 = scmp.eq.s32.totalorder %s85, 0
    %s88 = sadd.s32 %s87, 1
    %s89 = scalar_select %p86, %s87, %s88
    %p92 = pneg %p86
    %p93 = scmp.eq.s32.totalorder %s9, 1
    %p94 = por %p92, %p93
    %p95 = scmp.ne.s32.totalorder %s87, %s90
    %p96 = scmp.eq.s32.totalorder %s9, 0
    %p97 = por %p95, %p96
    %p98 = scmp.ne.s32.totalorder %s87, %s90
    %p99 = scmp.eq.s32.totalorder %s14, 1
    %p100 = por %p98, %p99
    %p101 = scmp.ne.s32.totalorder %s90, %s91
    %p102 = scmp.eq.s32.totalorder %s14, 0
    %p103 = por %p101, %p102
    %p104 = scmp.ne.s32.totalorder %s90, %s91
    %p105 = scmp.eq.s32.totalorder %s15, 1
    %p106 = por %p104, %p105
    %p108 = scmp.ne.s32.totalorder %s91, %s107
    %p109 = scmp.eq.s32.totalorder %s15, 0
    %p110 = por %p108, %p109
    %p111 = scmp.le.s32.totalorder 1, %s9
    %p112 = scmp.lt.s32.totalorder %s9, 3
    %p113 = pnand %p111, %p112
    %p114 = pneg %p113
    // Predicated region
    $region9: #{conv2d_pallas.1} parent=5 // pred_check
      _
    $region10: #{conv2d_pallas.1} parent=5 // pred_check_branch
      %116 = sbr.rel (%p113) target = $region12
    $region11: #{conv2d_pallas.1} parent=5 // pred_region
      %s117 = ssub.s32 %s9, 1
      // Predicated region
      $region13: #{conv2d_pallas.1} parent=11 // pred_check
        %p118 = pneg %p56
      $region14: #{conv2d_pallas.1} parent=11 // pred_check_branch
        %120 = sbr.rel (%p118) target = $region16
      $region15: #{conv2d_pallas.1} parent=11 // pred_region
        _
      $region16: #{conv2d_pallas.1} parent=11 // pred_fallthru
        _
      // Predicated region
      $region17: #{conv2d_pallas.1} parent=11 // pred_check
        %p121 = pneg %p77
      $region18: #{conv2d_pallas.1} parent=11 // pred_check_branch
        %123 = sbr.rel (%p121) target = $region20
      $region19: #{conv2d_pallas.1} parent=11 // pred_region
        _
      $region20: #{conv2d_pallas.1} parent=11 // pred_fallthru
        _
    $region12: #{conv2d_pallas.1} parent=5 // pred_fallthru
      _
    %p124 = scmp.lt.s32.totalorder %s9, 2
    // Predicated region
    $region21: #{conv2d_pallas.1} parent=5 // pred_check
      %p125 = pneg %p124
    $region22: #{conv2d_pallas.1} parent=5 // pred_check_branch
      %127 = sbr.rel (%p125) target = $region24
    $region23: #{conv2d_pallas.1} parent=5 // pred_region
      // Predicated region
      $region25: #{conv2d_pallas.1} parent=23 // pred_check
        %p128 = pneg %p29
      $region26: #{conv2d_pallas.1} parent=23 // pred_check_branch
        %130 = sbr.rel (%p128) target = $region28
      $region27: #{conv2d_pallas.1} parent=23 // pred_region
        %p131 = scmp.lt.s32.totalorder %s9, 1
        %s132 = scalar_select %p131, %s9, 1
        %s133 = smul.addr %s132, 3
        %s134 = smul.addr %s133, 4
        %s135 = scalar_lea.vmem %s0, %s134
      $region28: #{conv2d_pallas.1} parent=23 // pred_fallthru
        _
    $region24: #{conv2d_pallas.1} parent=5 // pred_fallthru
      _
    %p136 = scmp.le.s32.totalorder 1, %s9
    %p137 = scmp.lt.s32.totalorder %s9, 3
    %p138 = pnand %p136, %p137
    %p139 = pneg %p138
    // Predicated region
    $region29: #{conv2d_pallas.1} parent=5 // pred_check
      _
    $region30: #{conv2d_pallas.1} parent=5 // pred_check_branch
      %141 = sbr.rel (%p138) target = $region32
    $region31: #{conv2d_pallas.1} parent=5 // pred_region
      %s142 = ssub.s32 %s9, 1
      %p143 = scmp.lt.s32.totalorder %s14, 1
      %s144 = scalar_select %p143, %s14, 1
      %s145 = smul.addr %s144, 3
      %s146 = smul.addr %s145, 4
      %s147 = scalar_lea.vmem %s0, %s146
      %p148 = pneg %p35
      %p149 = pneg %p32
      %p150 = pneg %p56
      %p151 = pneg %p53
      %p152 = pneg %p77
      %p153 = pneg %p74
      %p154 = pneg %p103
      %p155 = pneg %p100
      %p156 = scmp.lt.s32.totalorder %s14, 1
      %s157 = scalar_select %p156, %s14, 1
      %s158 = smul.addr %s157, 2
      %s159 = smul.addr %s158, 8
      %s160 = scalar_lea.vmem %s3, %s159
      %p161 = scmp.lt.s32.totalorder %s14, 1
      %s162 = scalar_select %p161, %s14, 1
      %s163 = smul.addr %s162, 3
      %s164 = smul.addr %s163, 4
      %s165 = scalar_lea.vmem %s0, %s164
      %p166 = scmp.lt.s32.totalorder %s14, 1
      %s167 = scalar_select %p166, %s14, 1
      %s168 = smul.addr %s167, 2
      %s169 = smul.addr %s168, 8
      %s170 = scalar_lea.vmem %s3, %s169
      %v172 = vld [vmem:[%s165] sm:$0xff]
      %v173 = vunpack.c.l.bf16 %v172
      %v174 = vunpack.c.h.bf16 %v172
      %175 = vst [vmem:[#allocation2] sm:$0xff] %v173
      %176 = vst [vmem:[#allocation2 + $0x8] sm:$0xff] %v174
      %v177 = vld [vmem:[%s165] sm:$0xff]
      %v178 = vld [vmem:[%s165 + $0x8] sm:$0xf]
      %v179 = vunpack.c.l.bf16 %v177
      %v180 = vunpack.c.h.bf16 %v177
      %v181 = vunpack.c.l.bf16 %v178
      %185 = vrot.lane.b32.xlu0 %v179, 127
      %v186 = vpop.permute.xlu0 %185
      %187 = vrot.lane.b32.xlu0 %v180, 127
      %v188 = vpop.permute.xlu0 %187
      %189 = vrot.lane.b32.xlu0 %v181, 127
      %v190 = vpop.permute.xlu0 %189
      %vm191 = vcmask 1039360
      %v192 = vsel %vm191, %v186, %v188
      %v193 = vsel %vm191, %v188, %v190
      %196 = vst [vmem:[#allocation2 + $0x10] sm:$0xff] %v192
      %197 = vst [vmem:[#allocation2 + $0x18] sm:$0xff] %v193
      %v198 = vld [vmem:[%s165] sm:$0xff]
      %v199 = vld [vmem:[%s165 + $0x8] sm:$0xf]
      %v200 = vunpack.c.l.bf16 %v198
      %v201 = vunpack.c.h.bf16 %v198
      %v202 = vunpack.c.l.bf16 %v199
      %206 = vrot.lane.b32.xlu0 %v200, 126
      %v207 = vpop.permute.xlu0 %206
      %208 = vrot.lane.b32.xlu0 %v201, 126
      %v209 = vpop.permute.xlu0 %208
      %210 = vrot.lane.b32.xlu0 %v202, 126
      %v211 = vpop.permute.xlu0 %210
      %vm212 = vcmask 1031168
      %v213 = vsel %vm212, %v207, %v209
      %v214 = vsel %vm212, %v209, %v211
      %217 = vst [vmem:[#allocation2 + $0x20] sm:$0xff] %v213
      %218 = vst [vmem:[#allocation2 + $0x28] sm:$0xff] %v214
      %v219 = vld [vmem:[%s165] sm:$0xff]
      %v220 = vld [vmem:[%s165 + $0x8] sm:$0xf]
      %v221 = vunpack.c.l.bf16 %v219
      %v222 = vunpack.c.h.bf16 %v219
      %v223 = vunpack.c.l.bf16 %v220
      %227 = vrot.lane.b32.xlu0 %v221, 112
      %v228 = vpop.permute.xlu0 %227
      %229 = vrot.lane.b32.xlu0 %v222, 112
      %v230 = vpop.permute.xlu0 %229
      %231 = vrot.lane.b32.xlu0 %v223, 112
      %v232 = vpop.permute.xlu0 %231
      %vm233 = vcmask 916480
      %v234 = vsel %vm233, %v228, %v230
      %v235 = vsel %vm233, %v230, %v232
      %238 = vst [vmem:[#allocation2 + $0x30] sm:$0xff] %v234
      %239 = vst [vmem:[#allocation2 + $0x38] sm:$0xff] %v235
      %v240 = vld [vmem:[%s165] sm:$0xff]
      %v241 = vld [vmem:[%s165 + $0x8] sm:$0xf]
      %v242 = vunpack.c.l.bf16 %v240
      %v243 = vunpack.c.h.bf16 %v240
      %v244 = vunpack.c.l.bf16 %v241
      %248 = vrot.lane.b32.xlu0 %v242, 111
      %v249 = vpop.permute.xlu0 %248
      %250 = vrot.lane.b32.xlu0 %v243, 111
      %v251 = vpop.permute.xlu0 %250
      %252 = vrot.lane.b32.xlu0 %v244, 111
      %v253 = vpop.permute.xlu0 %252
      %vm254 = vcmask 908288
      %v255 = vsel %vm254, %v249, %v251
      %v256 = vsel %vm254, %v251, %v253
      %259 = vst [vmem:[#allocation2 + $0x40] sm:$0xff] %v255
      %260 = vst [vmem:[#allocation2 + $0x48] sm:$0xff] %v256
      %v261 = vld [vmem:[%s165] sm:$0xff]
      %v262 = vld [vmem:[%s165 + $0x8] sm:$0xf]
      %v263 = vunpack.c.l.bf16 %v261
      %v264 = vunpack.c.h.bf16 %v261
      %v265 = vunpack.c.l.bf16 %v262
      %269 = vrot.lane.b32.xlu0 %v263, 110
      %v270 = vpop.permute.xlu0 %269
      %271 = vrot.lane.b32.xlu0 %v264, 110
      %v272 = vpop.permute.xlu0 %271
      %273 = vrot.lane.b32.xlu0 %v265, 110
      %v274 = vpop.permute.xlu0 %273
      %vm275 = vcmask 900096
      %v276 = vsel %vm275, %v270, %v272
      %v277 = vsel %vm275, %v272, %v274
      %280 = vst [vmem:[#allocation2 + $0x50] sm:$0xff] %v276
      %281 = vst [vmem:[#allocation2 + $0x58] sm:$0xff] %v277
      %v282 = vld [vmem:[%s165] sm:$0xff]
      %v283 = vld [vmem:[%s165 + $0x8] sm:$0xf]
      %v284 = vunpack.c.l.bf16 %v282
      %v285 = vunpack.c.h.bf16 %v282
      %v286 = vunpack.c.l.bf16 %v283
      %290 = vrot.lane.b32.xlu0 %v284, 96
      %v291 = vpop.permute.xlu0 %290
      %292 = vrot.lane.b32.xlu0 %v285, 96
      %v293 = vpop.permute.xlu0 %292
      %294 = vrot.lane.b32.xlu0 %v286, 96
      %v295 = vpop.permute.xlu0 %294
      %vm296 = vcmask 785408
      %v297 = vsel %vm296, %v291, %v293
      %v298 = vsel %vm296, %v293, %v295
      %301 = vst [vmem:[#allocation2 + $0x60] sm:$0xff] %v297
      %302 = vst [vmem:[#allocation2 + $0x68] sm:$0xff] %v298
      %v303 = vld [vmem:[%s165] sm:$0xff]
      %v304 = vld [vmem:[%s165 + $0x8] sm:$0xf]
      %v305 = vunpack.c.l.bf16 %v303
      %v306 = vunpack.c.h.bf16 %v303
      %v307 = vunpack.c.l.bf16 %v304
      %311 = vrot.lane.b32.xlu0 %v305, 95
      %v312 = vpop.permute.xlu0 %311
      %313 = vrot.lane.b32.xlu0 %v306, 95
      %v314 = vpop.permute.xlu0 %313
      %315 = vrot.lane.b32.xlu0 %v307, 95
      %v316 = vpop.permute.xlu0 %315
      %vm317 = vcmask 777216
      %v318 = vsel %vm317, %v312, %v314
      %v319 = vsel %vm317, %v314, %v316
      %322 = vst [vmem:[#allocation2 + $0x70] sm:$0xff] %v318
      %323 = vst [vmem:[#allocation2 + $0x78] sm:$0xff] %v319
      %v324 = vld [vmem:[%s165] sm:$0xff]
      %v325 = vld [vmem:[%s165 + $0x8] sm:$0xf]
      %v326 = vunpack.c.l.bf16 %v324
      %v327 = vunpack.c.h.bf16 %v324
      %v328 = vunpack.c.l.bf16 %v325
      %332 = vrot.lane.b32.xlu0 %v326, 94
      %v333 = vpop.permute.xlu0 %332
      %334 = vrot.lane.b32.xlu0 %v327, 94
      %v335 = vpop.permute.xlu0 %334
      %336 = vrot.lane.b32.xlu0 %v328, 94
      %v337 = vpop.permute.xlu0 %336
      %vm338 = vcmask 769024
      %v339 = vsel %vm338, %v333, %v335
      %v340 = vsel %vm338, %v335, %v337
      %343 = vst [vmem:[#allocation2 + $0x80] sm:$0xff] %v339
      %344 = vst [vmem:[#allocation2 + $0x88] sm:$0xff] %v340
      %v345 = vld [vmem:[%s1] sm:$0xf]
      %v346 = vld [vmem:[#allocation2] sm:$0xff]
      %v347 = vld [vmem:[#allocation2 + $0x8] sm:$0xff]
      %v348 = vld [vmem:[#allocation2 + $0x10] sm:$0xff]
      %v349 = vld [vmem:[#allocation2 + $0x18] sm:$0xff]
      %v350 = vld [vmem:[#allocation2 + $0x20] sm:$0xff]
      %v351 = vld [vmem:[#allocation2 + $0x28] sm:$0xff]
      %v352 = vld [vmem:[#allocation2 + $0x30] sm:$0xff]
      %v353 = vld [vmem:[#allocation2 + $0x38] sm:$0xff]
      %v354 = vld [vmem:[#allocation2 + $0x40] sm:$0xff]
      %v355 = vld [vmem:[#allocation2 + $0x48] sm:$0xff]
      %v356 = vld [vmem:[#allocation2 + $0x50] sm:$0xff]
      %v357 = vld [vmem:[#allocation2 + $0x58] sm:$0xff]
      %v358 = vld [vmem:[#allocation2 + $0x60] sm:$0xff]
      %v359 = vld [vmem:[#allocation2 + $0x68] sm:$0xff]
      %v360 = vld [vmem:[#allocation2 + $0x70] sm:$0xff]
      %v361 = vld [vmem:[#allocation2 + $0x78] sm:$0xff]
      %v362 = vld [vmem:[#allocation2 + $0x80] sm:$0xff]
      %v363 = vld [vmem:[#allocation2 + $0x88] sm:$0xff]
      %v364 = vpack.c.bf16 %v348, %v346
      %v365 = vpack.c.bf16 %v349, %v347
      %v366 = vpack.c.bf16 %v352, %v350
      %v367 = vpack.c.bf16 %v353, %v351
      %v368 = vpack.c.bf16 %v356, %v354
      %v369 = vpack.c.bf16 %v357, %v355
      %v370 = vpack.c.bf16 %v360, %v358
      %v371 = vpack.c.bf16 %v361, %v359
      %v372 = vpack.c.bf16 %v362, %v362
      %v373 = vpack.c.bf16 %v363, %v363
      %v374 = vld [vmem:[%s2] sm:$0xff]
      %v375 = vld [vmem:[%s2 + $0x8] sm:$0xff]
      %vm376 = vcmask 588800
      %v378 = vsel %vm376, %v345, 0
      %vm380 = vcmask 1043456
      %v382 = vsel %vm380, %v372, 0
      %v385 = vsel %vm380, %v373, 0
      %387 = vmatpush.bf16.msra.mxu0 0
      %388 = vmatpush.bf16.msra.mxu0 0
      %389 = vmatpush.bf16.msra.mxu0 0
      %390 = vmatpush.bf16.msra.mxu0 %v382
      %391 = vmatpush.bf16.msra.mxu0 %v370
      %392 = vmatpush.bf16.msra.mxu0 %v368
      %393 = vmatpush.bf16.msra.mxu0 %v366
      %394 = vmatpush.bf16.msra.mxu0 %v364
      %395 = vmatmul.bf16.gmra.mxu0 %v378
      %v396 = vpop.f32.mrf.mxu0
      %v397 = vadd.f32 %v374, %v396
      %v398 = vpop.f32.mrf.mxu0
      %399 = vdwg.mxu0
      %400 = vmatpush.bf16.msra.mxu0 0
      %401 = vmatpush.bf16.msra.mxu0 0
      %402 = vmatpush.bf16.msra.mxu0 0
      %403 = vmatpush.bf16.msra.mxu0 %v385
      %404 = vmatpush.bf16.msra.mxu0 %v371
      %405 = vmatpush.bf16.msra.mxu0 %v369
      %406 = vmatpush.bf16.msra.mxu0 %v367
      %407 = vmatpush.bf16.msra.mxu0 %v365
      %408 = vmatmul.bf16.gmra.mxu0 %v378
      %v409 = vpop.f32.mrf.mxu0
      %v410 = vadd.f32 %v375, %v409
      %v411 = vpop.f32.mrf.mxu0
      %412 = vdwg.mxu0
      %413 = vst [vmem:[%s170] sm:$0xff] %v397
      %414 = vst [vmem:[%s170 + $0x8] sm:$0xff] %v410
      %p415 = scmp.lt.s32.totalorder %s14, 1
      %s416 = scalar_select %p415, %s14, 1
      %s417 = smul.addr %s416, 2
      %s418 = smul.addr %s417, 8
      %s419 = scalar_lea.vmem %s3, %s418
      // Predicated region
      $region33: #{conv2d_pallas.1} parent=31 // pred_check
        %p420 = pneg %p100
      $region34: #{conv2d_pallas.1} parent=31 // pred_check_branch
        %422 = sbr.rel (%p420) target = $region36
      $region35: #{conv2d_pallas.1} parent=31 // pred_region
        _
      $region36: #{conv2d_pallas.1} parent=31 // pred_fallthru
        _
    $region32: #{conv2d_pallas.1} parent=5 // pred_fallthru
      _
    %p423 = scmp.le.s32.totalorder 2, %s9
    // Predicated region
    $region37: #{conv2d_pallas.1} parent=5 // pred_check
      %p424 = pneg %p423
    $region38: #{conv2d_pallas.1} parent=5 // pred_check_branch
      %426 = sbr.rel (%p424) target = $region40
    $region39: #{conv2d_pallas.1} parent=5 // pred_region
      %s427 = ssub.s32 %s9, 2
      // Predicated region
      $region41: #{conv2d_pallas.1} parent=39 // pred_check
        %p428 = pneg %p106
      $region42: #{conv2d_pallas.1} parent=39 // pred_check_branch
        %430 = sbr.rel (%p428) target = $region44
      $region43: #{conv2d_pallas.1} parent=39 // pred_region
        %p431 = scmp.lt.s32.totalorder %s15, 1
        %s432 = scalar_select %p431, %s15, 1
        %s433 = smul.addr %s432, 2
        %s434 = smul.addr %s433, 8
        %s435 = scalar_lea.vmem %s3, %s434
      $region44: #{conv2d_pallas.1} parent=39 // pred_fallthru
        _
    $region40: #{conv2d_pallas.1} parent=5 // pred_fallthru
      _
  $region6: #{conv2d_pallas.1} parent=0 // loop_footer
    %s13 = sadd.s32 1, %s9
  $region7: #{conv2d_pallas.1} parent=0 // loop_footer_branch
    %8 = sbr.rel target = $region3
  $region8: #{conv2d_pallas.1} parent=0 // loop_exit
    _

</llo_original>
